<compile_context>
chip_gen: v5e
topology: v5e:2x2
jax: 0.10.0
libtpu: 0.0.40
codegen_flags: <defaults>
</compile_context>

<pallas_src>
import math

import jax
import jax.numpy as jnp
from jax import lax
from jax.experimental import pallas as pl
from jax.experimental.pallas import tpu as pltpu


def _linear_with_channel_kernel(x_ref, w_ref, b_ref, o_ref):
    # x_ref: (cc, I, bb)  channel-major activations, batch on the LANE axis
    # w_ref: (cc, O, I)   weights in the module's native layout (no transpose)
    # b_ref: (cc, O, 1)
    # o_ref: (cc, O, bb)  lane-dense output block (bb is a multiple of 128)
    acc = lax.dot_general(
        w_ref[...],
        x_ref[...],
        dimension_numbers=(((2,), (1,)), ((0,), (0,))),  # contract I, batch over c
        preferred_element_type=jnp.float32,
    )                                                    # (cc, O, bb) f32
    acc = acc + b_ref[...].astype(jnp.float32)           # (cc, O, 1) broadcasts over lanes
    o_ref[...] = acc.astype(o_ref.dtype)


def _round_up(x, m):
    return ((x + m - 1) // m) * m


def _largest_divisor_at_most(n, cap):
    cap = max(1, min(cap, n))
    for d in range(cap, 0, -1):
        if n % d == 0:
            return d
    return 1


def _vmem_capacity_bytes():
    try:
        return int(pltpu.get_tpu_info().vmem_capacity_bytes)
    except Exception:
        return 64 * 2 ** 20  # conservative (v7x-sized) fallback


def linear_with_channel(x, w, b, *, compute_dtype=None):
    """Per-channel linear.  x: (..., C, I), w: (C, O, I), b: (C, O) -> (..., C, O)."""
    C, O, I = w.shape
    assert x.shape[-1] == I and x.shape[-2] == C and b.shape == (C, O)

    out_dtype = jnp.result_type(x.dtype, w.dtype)
    lead = x.shape[:-2]
    xf = x.reshape((-1, C, I))
    B = xf.shape[0]

    cdt = compute_dtype if compute_dtype is not None else x.dtype
    in_isz = jnp.dtype(cdt).itemsize
    out_isz = jnp.dtype(out_dtype).itemsize
    b_isz = jnp.dtype(b.dtype).itemsize

    def working_set(cc_, bb_):
        # BlockSpec double-buffers every operand (hence the single leading 2x).
        x_t = cc_ * I * bb_ * in_isz
        w_t = cc_ * O * I * in_isz
        b_t = cc_ * O * b_isz
        o_t = cc_ * O * bb_ * out_isz
        return 2 * (x_t + w_t + b_t + o_t)

    vmem_cap = _vmem_capacity_bytes()
    budget = (vmem_cap * 3) // 4  # ~48 MiB on v7x (64 MiB), ~96 MiB on v5e/v6e (128 MiB)

    # Block sizes: whole I and O per step; batch tile bb is 128-aligned and grown
    # toward 2048 as the double-buffered working set allows; cc fuses channels.
    cc = _largest_divisor_at_most(C, 8)
    bb = min(2048, _round_up(max(B, 1), 128))
    while bb > 128 and working_set(cc, bb) > budget:
        bb -= 128
    while cc > 1 and working_set(cc, bb) > budget:
        cc = _largest_divisor_at_most(C, cc - 1)

    Bp = _round_up(max(B, 1), bb)
    nb = Bp // bb
    if nb < 2 and C > 1 and C // cc < 2:
        # Give the second TensorCore (v7x megacore) work via the channel axis.
        cc = _largest_divisor_at_most(C, max(1, C // 2))

    # Wrapper-side layout plumbing (kept out of the kernel): channel-major x with
    # batch on the trailing (lane) axis, zero-padded batch; bias gets a trailing
    # singleton so it broadcasts over lanes and its block is last-dim-friendly.
    x_cm = jnp.transpose(xf, (1, 2, 0))              # (C, I, B)
    if Bp != B:
        x_cm = jnp.pad(x_cm, ((0, 0), (0, 0), (0, Bp - B)))
    if compute_dtype is not None:                    # e.g. jnp.bfloat16 on v5e/v6e/v7x
        x_cm = x_cm.astype(compute_dtype)
        w = w.astype(compute_dtype)
    b3 = b[:, :, None]                               # (C, O, 1)

    vmem_limit = int(min(budget, max(working_set(cc, bb) + (4 << 20), 32 << 20)))

    out_cob = pl.pallas_call(
        _linear_with_channel_kernel,
        out_shape=jax.ShapeDtypeStruct((C, O, Bp), out_dtype),
        grid_spec=pltpu.PrefetchScalarGridSpec(
            num_scalar_prefetch=0,
            # Batch innermost: weight/bias block indices are constant across
            # consecutive steps -> Pallas skips their re-DMA (weights resident).
            grid=(C // cc, Bp // bb),
            in_specs=[
                pl.BlockSpec((cc, I, bb), lambda ci, bi: (ci, 0, bi)),
                pl.BlockSpec((cc, O, I), lambda ci, bi: (ci, 0, 0)),
                pl.BlockSpec((cc, O, 1), lambda ci, bi: (ci, 0, 0)),
            ],
            out_specs=pl.BlockSpec((cc, O, bb), lambda ci, bi: (ci, 0, bi)),
        ),
        compiler_params=pltpu.CompilerParams(
            dimension_semantics=("parallel", "parallel"),
            vmem_limit_bytes=vmem_limit,
        ),
    )(x_cm, w, b3)

    # Back to the module's (..., C, O) layout.
    out = jnp.transpose(out_cob[:, :, :B], (2, 0, 1))    # (B, C, O)
    return out.reshape(lead + (C, O))


def init_params(key, input_size, output_size, channel_size, dtype=jnp.float32):
    """Deterministic init mimicking the PyTorch module's reset_parameters.

    kaiming_uniform_(w, a=sqrt(3)): gain = sqrt(2/(1+3)) = sqrt(1/2);
    for a (C, O, I) tensor, PyTorch fan_in = O * I (dim 1 * receptive field),
    weight bound = gain * sqrt(3 / fan_in); bias bound = 1 / sqrt(fan_in).
    """
    kw, kb = jax.random.split(key)
    fan_in = output_size * input_size
    w_bound = math.sqrt(0.5) * math.sqrt(3.0 / fan_in)
    b_bound = 1.0 / math.sqrt(fan_in)
    w = jax.random.uniform(
        kw, (channel_size, output_size, input_size), dtype,
        minval=-w_bound, maxval=w_bound)
    b = jax.random.uniform(
        kb, (channel_size, output_size), dtype,
        minval=-b_bound, maxval=b_bound)
    return w, b


if __name__ == "__main__":
    key = jax.random.PRNGKey(0)
    k_x, k_p = jax.random.split(key)

    B, C, I, O = 8, 4, 32, 16  # batch, channel_size, input_size, output_size

    x = jax.random.normal(k_x, (B, C, I), jnp.float32)
    w, b = init_params(k_p, input_size=I, output_size=O, channel_size=C)

    out = linear_with_channel(x, w, b)
    out = jax.block_until_ready(out)

    # Pure-JAX reference of the PyTorch forward.
    ref = jnp.einsum("coi,bci->bco", w, x) + b[None, :, :]
    assert out.shape == (B, C, O)
    assert jnp.allclose(out, ref, atol=1e-5, rtol=1e-5)

    print("KERNEL_OK")
</pallas_src>

<mosaic_0001>
module attributes {stable_mosaic.version = 11 : i64} {
  func.func @_linear_with_channel_kernel(%arg0: i32, %arg1: i32, %arg2: memref<2x32x128xf32, #tpu.memory_space<vmem>>, %arg3: memref<2x16x32xf32, #tpu.memory_space<vmem>>, %arg4: memref<2x16x1xf32, #tpu.memory_space<vmem>>, %arg5: memref<2x16x128xf32, #tpu.memory_space<vmem>>) attributes {dimension_semantics = [#tpu.dimension_semantics<parallel>, #tpu.dimension_semantics<parallel>], iteration_bounds = array<i64: 2, 1>, scalar_prefetch = 0 : i64, scratch_operands = 0 : i64, tpu.core_type = #tpu.core_type<tc>, window_params = [{transform_indices = @transform_0, window_bounds = array<i64: 2, 32, 128>}, {transform_indices = @transform_1, window_bounds = array<i64: 2, 16, 32>}, {transform_indices = @transform_2, window_bounds = array<i64: 2, 16, 1>}, {transform_indices = @transform_3, window_bounds = array<i64: 2, 16, 128>}]} {
    %c0 = arith.constant 0 : index
    %c0_0 = arith.constant 0 : index
    %c0_1 = arith.constant 0 : index
    %0 = vector.load %arg3[%c0, %c0_0, %c0_1] : memref<2x16x32xf32, #tpu.memory_space<vmem>>, vector<2x16x32xf32>
    %c0_2 = arith.constant 0 : index
    %c0_3 = arith.constant 0 : index
    %c0_4 = arith.constant 0 : index
    %1 = vector.load %arg2[%c0_2, %c0_3, %c0_4] : memref<2x32x128xf32, #tpu.memory_space<vmem>>, vector<2x32x128xf32>
    %cst = arith.constant dense<0.000000e+00> : vector<2x16x128xf32>
    %2 = tpu.matmul %0, %1, %cst {dimension_numbers = #tpu.dot_dimension_numbers<[2], [1], [1], [2], [0, 0, 0, 1, 1, 2], [0], [0]>} : vector<2x16x32xf32>, vector<2x32x128xf32>, vector<2x16x128xf32> -> vector<2x16x128xf32>
    %c0_5 = arith.constant 0 : index
    %c0_6 = arith.constant 0 : index
    %c0_7 = arith.constant 0 : index
    %3 = vector.load %arg4[%c0_5, %c0_6, %c0_7] : memref<2x16x1xf32, #tpu.memory_space<vmem>>, vector<2x16x1xf32>
    %4 = vector.broadcast %3 : vector<2x16x1xf32> to vector<2x16x128xf32>
    %5 = arith.addf %2, %4 : vector<2x16x128xf32>
    %c0_8 = arith.constant 0 : index
    %c0_9 = arith.constant 0 : index
    %c0_10 = arith.constant 0 : index
    %6 = vector.load %arg5[%c0_8, %c0_9, %c0_10] : memref<2x16x128xf32, #tpu.memory_space<vmem>>, vector<2x16x128xf32>
    tpu.vector_store %arg5[%c0_8, %c0_9, %c0_10], %5 {strides = array<i32>} : memref<2x16x128xf32, #tpu.memory_space<vmem>>, vector<2x16x128xf32>,
    return
  }
  func.func @transform_0(%arg0: i32, %arg1: i32) -> (i32, i32, i32) {
    %c0_i32 = arith.constant 0 : i32
    %c0_i32_0 = arith.constant 0 : i32
    return %arg0, %c0_i32, %arg1 : i32, i32, i32
  }
  func.func @transform_1(%arg0: i32, %arg1: i32) -> (i32, i32, i32) {
    %c0_i32 = arith.constant 0 : i32
    %c0_i32_0 = arith.constant 0 : i32
    %c0_i32_1 = arith.constant 0 : i32
    return %arg0, %c0_i32, %c0_i32_0 : i32, i32, i32
  }
  func.func @transform_2(%arg0: i32, %arg1: i32) -> (i32, i32, i32) {
    %c0_i32 = arith.constant 0 : i32
    %c0_i32_0 = arith.constant 0 : i32
    %c0_i32_1 = arith.constant 0 : i32
    return %arg0, %c0_i32, %c0_i32_0 : i32, i32, i32
  }
  func.func @transform_3(%arg0: i32, %arg1: i32) -> (i32, i32, i32) {
    %c0_i32 = arith.constant 0 : i32
    %c0_i32_0 = arith.constant 0 : i32
    return %arg0, %c0_i32, %arg1 : i32, i32, i32
  }
}

</mosaic_0001>

<llo_original>
// kernel: tpu_custom_call.1
$region0: #{tpu_custom_call.1}
  #allocation0 [shape = 'u32[]', space=smem, size = 0x4, offset = 0x4, fixed_abs, tag = 'smem constant byte address 0x4 - core index']
  #allocation1 [shape = 'u32[72,128]{1,0:T(1,128)}', space=vmem, size = 0x9000, scoped, tag = 'internal scratch']
  %s0 = inlined_call_operand.hbm [shape: f32[4,32,128], index: 0, kind: input, shape index: {}]
  %s1 = inlined_call_operand.vmem [shape: f32[4,16,32], index: 1, kind: input, shape index: {}]
  %s2 = inlined_call_operand.vmem [shape: f32[4,16,1], index: 2, kind: input, shape index: {}]
  %s3 = inlined_call_operand.hbm [shape: f32[4,16,128], index: 3, kind: output, shape index: {}]
  %s4 = sld [smem:[#allocation0]]
  $region49: #{tpu_custom_call.1} parent=0
    _
  %s6 = ssub.s32 1, %s4
  %s7 = scalar_select 0, %s6, %s4
  $region1: #{tpu_custom_call.1} parent=0
    #allocation2 [shape = 'u8[65536]{0}', space=vmem, size = 0x10000, scoped, tag = 'input window, operand 0']
    #allocation3 [shape = 's32[2]{0}', space=sflag, size = 0x8, scoped, tag = 'scoped memory for tpu_custom_call.1']
    #allocation4 [shape = 's32[2]{0}', space=sflag, size = 0x8, scoped, tag = 'scoped memory for tpu_custom_call.1']
    #allocation5 [shape = 'u8[32768]{0}', space=vmem, size = 0x8000, scoped, tag = 'output window, operand 0']
    %8 = vsyncpa [#allocation3], 0
    %s9 = scalar_lea.sflag [#allocation3], 1
    %10 = vsyncpa %s9, 0
    %11 = vsyncpa [#allocation4], 0
    %s12 = scalar_lea.sflag [#allocation4], 1
    %13 = vsyncpa %s12, 0
    loop: start=0, step=1, limit=4
    $region2: #{tpu_custom_call.1} parent=1 // loop_pre_header
      _
    $region3: #{tpu_custom_call.1} parent=1 // loop_header
      %s15 = sphi 0, %s19
      %p16 = scmp.ge.s32.totalorder %s15, 4
      %s22 = sphi 0, %s34
      %s23 = sphi 0, %s30
      %s24 = sphi 0, %s22
      %s25 = sphi 0, %s23
      %s26 = sphi 0, %s24
      %s27 = sphi 0, %s25
      %s39 = sphi 0, %s41
      %s42 = sphi 0, %s39
      %s43 = sphi 0, %s42
      %s59 = sphi 0, %s43
      %s65 = sphi 0, %s67
      %s68 = sphi 0, %s65
      %s69 = sphi 0, %s68
      %s85 = sphi 0, %s69
      %s91 = sphi 0, %s93
      %s94 = sphi 0, %s91
      %s95 = sphi 0, %s94
      %s111 = sphi 0, %s95
      %s119 = sphi 0, %s121
      %s122 = sphi 0, %s119
      %s123 = sphi 0, %s122
      %s139 = sphi 0, %s123
    $region4: #{tpu_custom_call.1} parent=1 // loop_header_branch
      %18 = sbr.rel (%p16) target = $region8
    $region5: #{tpu_custom_call.1} parent=1 // loop_body
      %s20 = ssub.s32 %s15, 1
      %s21 = ssub.s32 %s15, 2
      %s28 = sadd.s32 1, %s23
      %p29 = scmp.ge.s32.totalorder %s28, 1
      %s30 = scalar_select %p29, 0, %s28
      %s31 = sadd.s32 1, %s22
      %s32 = scalar_select %p29, %s31, %s22
      %p33 = scmp.ge.s32.totalorder %s32, 2
      %s34 = scalar_select %p33, 0, %s32
      %s35 = ssub.s32 %s22, %s34
      %s36 = ssub.s32 %s23, %s30
      %s37 = sor.u32 %s35, %s36
      %p38 = scmp.eq.s32.totalorder %s37, 0
      %s40 = sadd.s32 %s39, 1
      %s41 = scalar_select %p38, %s39, %s40
      %p44 = pneg %p38
      %p45 = scmp.eq.s32.totalorder %s15, 1
      %p46 = por %p44, %p45
      %p47 = scmp.ne.s32.totalorder %s39, %s42
      %p48 = scmp.eq.s32.totalorder %s15, 0
      %p49 = por %p47, %p48
      %p50 = scmp.ne.s32.totalorder %s39, %s42
      %p51 = scmp.eq.s32.totalorder %s20, 1
      %p52 = por %p50, %p51
      %p53 = scmp.ne.s32.totalorder %s42, %s43
      %p54 = scmp.eq.s32.totalorder %s20, 0
      %p55 = por %p53, %p54
      %p56 = scmp.ne.s32.totalorder %s42, %s43
      %p57 = scmp.eq.s32.totalorder %s21, 1
      %p58 = por %p56, %p57
      %p60 = scmp.ne.s32.totalorder %s43, %s59
      %p61 = scmp.eq.s32.totalorder %s21, 0
      %p62 = por %p60, %p61
      %s63 = ssub.s32 %s22, %s34
      %p64 = scmp.eq.s32.totalorder %s63, 0
      %s66 = sadd.s32 %s65, 1
      %s67 = scalar_select %p64, %s65, %s66
      %p70 = pneg %p64
      %p71 = scmp.eq.s32.totalorder %s15, 1
      %p72 = por %p70, %p71
      %p73 = scmp.ne.s32.totalorder %s65, %s68
      %p74 = scmp.eq.s32.totalorder %s15, 0
      %p75 = por %p73, %p74
      %p76 = scmp.ne.s32.totalorder %s65, %s68
      %p77 = scmp.eq.s32.totalorder %s20, 1
      %p78 = por %p76, %p77
      %p79 = scmp.ne.s32.totalorder %s68, %s69
      %p80 = scmp.eq.s32.totalorder %s20, 0
      %p81 = por %p79, %p80
      %p82 = scmp.ne.s32.totalorder %s68, %s69
      %p83 = scmp.eq.s32.totalorder %s21, 1
      %p84 = por %p82, %p83
      %p86 = scmp.ne.s32.totalorder %s69, %s85
      %p87 = scmp.eq.s32.totalorder %s21, 0
      %p88 = por %p86, %p87
      %s89 = ssub.s32 %s22, %s34
      %p90 = scmp.eq.s32.totalorder %s89, 0
      %s92 = sadd.s32 %s91, 1
      %s93 = scalar_select %p90, %s91, %s92
      %p96 = pneg %p90
      %p97 = scmp.eq.s32.totalorder %s15, 1
      %p98 = por %p96, %p97
      %p99 = scmp.ne.s32.totalorder %s91, %s94
      %p100 = scmp.eq.s32.totalorder %s15, 0
      %p101 = por %p99, %p100
      %p102 = scmp.ne.s32.totalorder %s91, %s94
      %p103 = scmp.eq.s32.totalorder %s20, 1
      %p104 = por %p102, %p103
      %p105 = scmp.ne.s32.totalorder %s94, %s95
      %p106 = scmp.eq.s32.totalorder %s20, 0
      %p107 = por %p105, %p106
      %p108 = scmp.ne.s32.totalorder %s94, %s95
      %p109 = scmp.eq.s32.totalorder %s21, 1
      %p110 = por %p108, %p109
      %p112 = scmp.ne.s32.totalorder %s95, %s111
      %p113 = scmp.eq.s32.totalorder %s21, 0
      %p114 = por %p112, %p113
      %s115 = ssub.s32 %s22, %s34
      %s116 = ssub.s32 %s23, %s30
      %s117 = sor.u32 %s115, %s116
      %p118 = scmp.eq.s32.totalorder %s117, 0
      %s120 = sadd.s32 %s119, 1
      %s121 = scalar_select %p118, %s119, %s120
      %p124 = pneg %p118
      %p125 = scmp.eq.s32.totalorder %s15, 1
      %p126 = por %p124, %p125
      %p127 = scmp.ne.s32.totalorder %s119, %s122
      %p128 = scmp.eq.s32.totalorder %s15, 0
      %p129 = por %p127, %p128
      %p130 = scmp.ne.s32.totalorder %s119, %s122
      %p131 = scmp.eq.s32.totalorder %s20, 1
      %p132 = por %p130, %p131
      %p133 = scmp.ne.s32.totalorder %s122, %s123
      %p134 = scmp.eq.s32.totalorder %s20, 0
      %p135 = por %p133, %p134
      %p136 = scmp.ne.s32.totalorder %s122, %s123
      %p137 = scmp.eq.s32.totalorder %s21, 1
      %p138 = por %p136, %p137
      %p140 = scmp.ne.s32.totalorder %s123, %s139
      %p141 = scmp.eq.s32.totalorder %s21, 0
      %p142 = por %p140, %p141
      %p143 = scmp.le.s32.totalorder 1, %s15
      %p144 = scmp.lt.s32.totalorder %s15, 3
      %p145 = pnand %p143, %p144
      %p146 = pneg %p145
      // Predicated region
      $region9: #{tpu_custom_call.1} parent=5 // pred_check
        _
      $region10: #{tpu_custom_call.1} parent=5 // pred_check_branch
        %148 = sbr.rel (%p145) target = $region12
      $region11: #{tpu_custom_call.1} parent=5 // pred_region
        %s149 = ssub.s32 %s15, 1
      $region12: #{tpu_custom_call.1} parent=5 // pred_fallthru
        _
      %p150 = scmp.lt.s32.totalorder %s15, 2
      // Predicated region
      $region13: #{tpu_custom_call.1} parent=5 // pred_check
        %p151 = pneg %p150
      $region14: #{tpu_custom_call.1} parent=5 // pred_check_branch
        %153 = sbr.rel (%p151) target = $region16
      $region15: #{tpu_custom_call.1} parent=5 // pred_region
        // Predicated region
        $region17: #{tpu_custom_call.1} parent=15 // pred_check
          %p154 = pneg %p49
        $region18: #{tpu_custom_call.1} parent=15 // pred_check_branch
          %156 = sbr.rel (%p154) target = $region20
        $region19: #{tpu_custom_call.1} parent=15 // pred_region
          %s157 = sand.u32 %s39, 1
          %s158 = scalar_lea.sflag [#allocation3], %s157
          %s159 = sand.u32 %s39, 1
          %s160 = smul.addr %s159, 64
          %s161 = scalar_lea.vmem [#allocation2], %s160
          %s162 = smul.u32 2, %s22
          %164 = vsyncadd %s158, 0
          %s165 = smul.addr %s162, 4
          %s166 = sadd.s32 %s23, %s165
          %s167 = smul.addr %s166, 8
          %s168 = scalar_lea.hbm %s0, %s167
          %s169 = sshll.u32 %s168, 4
          %s170 = int_to_ptr.hbm [resolvable:$true] %s169
          %s171 = sshll.u32 %s161, 4
          %s172 = int_to_ptr.vmem [resolvable:$true] %s171
          %177 = dma.hbm_to_vmem [thread:$0]  %s170, 1024, %s172, %s158, 128, 128, 8
        $region20: #{tpu_custom_call.1} parent=15 // pred_fallthru
          _
        // Predicated region
        $region21: #{tpu_custom_call.1} parent=15 // pred_check
          %p178 = pneg %p75
        $region22: #{tpu_custom_call.1} parent=15 // pred_check_branch
          %180 = sbr.rel (%p178) target = $region24
        $region23: #{tpu_custom_call.1} parent=15 // pred_region
          %s181 = smul.u32 2, %s22
          %p182 = scmp.lt.s32.totalorder %s181, 3
          %s183 = scalar_select %p182, %s181, 3
          %s184 = smul.addr %s183, 2
          %s185 = smul.addr %s184, 8
          %s186 = scalar_lea.vmem %s1, %s185
          %s187 = smul.u32 2, %s22
        $region24: #{tpu_custom_call.1} parent=15 // pred_fallthru
          _
        // Predicated region
        $region25: #{tpu_custom_call.1} parent=15 // pred_check
          %p188 = pneg %p101
        $region26: #{tpu_custom_call.1} parent=15 // pred_check_branch
          %190 = sbr.rel (%p188) target = $region28
        $region27: #{tpu_custom_call.1} parent=15 // pred_region
          %s191 = smul.u32 2, %s22
          %p192 = scmp.lt.s32.totalorder %s191, 3
          %s193 = scalar_select %p192, %s191, 3
          %s194 = smul.addr %s193, 2
          %s195 = smul.addr %s194, 8
          %s196 = scalar_lea.vmem %s2, %s195
          %s197 = smul.u32 2, %s22
        $region28: #{tpu_custom_call.1} parent=15 // pred_fallthru
          _
      $region16: #{tpu_custom_call.1} parent=5 // pred_fallthru
        _
      %p198 = scmp.le.s32.totalorder 1, %s15
      %p199 = scmp.lt.s32.totalorder %s15, 3
      %p200 = pnand %p198, %p199
      %p201 = pneg %p200
      // Predicated region
      $region29: #{tpu_custom_call.1} parent=5 // pred_check
        _
      $region30: #{tpu_custom_call.1} parent=5 // pred_check_branch
        %203 = sbr.rel (%p200) target = $region32
      $region31: #{tpu_custom_call.1} parent=5 // pred_region
        %s204 = ssub.s32 %s15, 1
        %s205 = sand.u32 %s42, 1
        %s206 = scalar_lea.sflag [#allocation3], %s205
        %s207 = sand.u32 %s42, 1
        %s208 = smul.addr %s207, 64
        %s209 = scalar_lea.vmem [#allocation2], %s208
        // Predicated region
        $region33: #{tpu_custom_call.1} parent=31 // pred_check
          %p210 = pneg %p55
        $region34: #{tpu_custom_call.1} parent=31 // pred_check_branch
          %212 = sbr.rel (%p210) target = $region36
        $region35: #{tpu_custom_call.1} parent=31 // pred_region
          %214 = dma.done %s206, 1024
        $region36: #{tpu_custom_call.1} parent=31 // pred_fallthru
          _
        %s215 = sand.u32 %s42, 1
        %s216 = scalar_lea.sflag [#allocation3], %s215
        %s217 = sand.u32 %s42, 1
        %s218 = smul.addr %s217, 64
        %s219 = scalar_lea.vmem [#allocation2], %s218
        %p220 = pneg %p55
        %p221 = pneg %p52
        %s222 = smul.u32 2, %s24
        %p223 = scmp.lt.s32.totalorder %s222, 3
        %s224 = scalar_select %p223, %s222, 3
        %s225 = smul.addr %s224, 2
        %s226 = smul.addr %s225, 8
        %s227 = scalar_lea.vmem %s1, %s226
        %p228 = pneg %p81
        %p229 = pneg %p78
        %s230 = smul.u32 2, %s24
        %p231 = scmp.lt.s32.totalorder %s230, 3
        %s232 = scalar_select %p231, %s230, 3
        %s233 = smul.addr %s232, 2
        %s234 = smul.addr %s233, 8
        %s235 = scalar_lea.vmem %s2, %s234
        %p236 = pneg %p107
        %p237 = pneg %p104
        %p238 = pneg %p135
        %p239 = pneg %p132
        %s240 = sand.u32 %s122, 1
        %s241 = scalar_lea.sflag [#allocation4], %s240
        %s242 = sand.u32 %s122, 1
        %s243 = smul.addr %s242, 32
        %s244 = scalar_lea.vmem [#allocation5], %s243
        %s245 = smul.u32 2, %s24
        %s246 = smul.u32 2, %s24
        %p247 = scmp.lt.s32.totalorder %s246, 3
        %s248 = scalar_select %p247, %s246, 3
        %s249 = smul.addr %s248, 2
        %s250 = smul.addr %s249, 8
        %s251 = scalar_lea.vmem %s1, %s250
        %s252 = smul.u32 2, %s24
        %s253 = smul.u32 2, %s24
        %p254 = scmp.lt.s32.totalorder %s253, 3
        %s255 = scalar_select %p254, %s253, 3
        %s256 = smul.addr %s255, 2
        %s257 = smul.addr %s256, 8
        %s258 = scalar_lea.vmem %s2, %s257
        %s259 = smul.u32 2, %s24
        %s260 = smul.u32 2, %s24
        %v261 = vld [vmem:[%s251] sm:$0xff]
        %v262 = vld [vmem:[%s251 + $0x8] sm:$0xff]
        %v263 = vld [vmem:[%s251 + $0x10] sm:$0xff]
        %v264 = vld [vmem:[%s251 + $0x18] sm:$0xff]
        %v265 = vld [vmem:[%s209] sm:$0xff]
        %v266 = vld [vmem:[%s209 + $0x8] sm:$0xff]
        %v267 = vld [vmem:[%s209 + $0x10] sm:$0xff]
        %v268 = vld [vmem:[%s209 + $0x18] sm:$0xff]
        %v269 = vld [vmem:[%s209 + $0x20] sm:$0xff]
        %v270 = vld [vmem:[%s209 + $0x28] sm:$0xff]
        %v271 = vld [vmem:[%s209 + $0x30] sm:$0xff]
        %v272 = vld [vmem:[%s209 + $0x38] sm:$0xff]
        %v273 = vld [vmem:[%s258] sm:$0xff]
        %v274 = vld [vmem:[%s258 + $0x8] sm:$0xff]
        %v275 = vld [vmem:[%s258 + $0x10] sm:$0xff]
        %v276 = vld [vmem:[%s258 + $0x18] sm:$0xff]
        %278 = vset.pattern.permute.xlu0 0
        %279 = vperm.xlu0 %278, %v273
        %v280 = vpop.permute.xlu0 %279
        %283 = vset.pattern.permute.xlu0 0
        %284 = vperm.xlu0 %283, %v274
        %v285 = vpop.permute.xlu0 %284
        %288 = vset.pattern.permute.xlu0 0
        %289 = vperm.xlu0 %288, %v275
        %v290 = vpop.permute.xlu0 %289
        %293 = vset.pattern.permute.xlu0 0
        %294 = vperm.xlu0 %293, %v276
        %v295 = vpop.permute.xlu0 %294
        %vm297 = vcmask 261120
        %v299 = vsel %vm297, %v261, 0
        %v302 = vsel %vm297, %v262, 0
        %304 = vmatpush.msra.mxu0 0.0
        %305 = vmatpush.msra.mxu0 0.0
        %306 = vmatpush.msra.mxu0 0.0
        %307 = vmatpush.msra.mxu0 0.0
        %308 = vmatpush.msra.mxu0 0.0
        %309 = vmatpush.msra.mxu0 0.0
        %310 = vmatpush.msra.mxu0 0.0
        %311 = vmatpush.msra.mxu0 0.0
        %312 = vmatpush.msra.mxu0 0.0
        %313 = vmatpush.msra.mxu0 0.0
        %314 = vmatpush.msra.mxu0 0.0
        %315 = vmatpush.msra.mxu0 0.0
        %316 = vmatpush.msra.mxu0 %v268
        %317 = vmatpush.msra.mxu0 %v267
        %318 = vmatpush.msra.mxu0 %v266
        %319 = vmatpush.msra.mxu0 %v265
        %320 = vmatmul.f32.gmra.mxu0 %v299
        %v321 = vpop.f32.mrf.mxu0
        %v322 = vadd.f32 %v280, %v321
        %323 = vmatmul.f32.gmra.mxu0 %v302
        %v324 = vpop.f32.mrf.mxu0
        %v325 = vadd.f32 %v285, %v324
        %326 = vdwg.mxu0
        %v328 = vsel %vm297, %v263, 0
        %v331 = vsel %vm297, %v264, 0
        %333 = vmatpush.msra.mxu0 0.0
        %334 = vmatpush.msra.mxu0 0.0
        %335 = vmatpush.msra.mxu0 0.0
        %336 = vmatpush.msra.mxu0 0.0
        %337 = vmatpush.msra.mxu0 0.0
        %338 = vmatpush.msra.mxu0 0.0
        %339 = vmatpush.msra.mxu0 0.0
        %340 = vmatpush.msra.mxu0 0.0
        %341 = vmatpush.msra.mxu0 0.0
        %342 = vmatpush.msra.mxu0 0.0
        %343 = vmatpush.msra.mxu0 0.0
        %344 = vmatpush.msra.mxu0 0.0
        %345 = vmatpush.msra.mxu0 %v272
        %346 = vmatpush.msra.mxu0 %v271
        %347 = vmatpush.msra.mxu0 %v270
        %348 = vmatpush.msra.mxu0 %v269
        %349 = vmatmul.f32.gmra.mxu0 %v328
        %v350 = vpop.f32.mrf.mxu0
        %v351 = vadd.f32 %v290, %v350
        %352 = vmatmul.f32.gmra.mxu0 %v331
        %v353 = vpop.f32.mrf.mxu0
        %v354 = vadd.f32 %v295, %v353
        %355 = vdwg.mxu0
        %356 = vst [vmem:[%s244] sm:$0xff] %v322
        %357 = vst [vmem:[%s244 + $0x8] sm:$0xff] %v325
        %358 = vst [vmem:[%s244 + $0x10] sm:$0xff] %v351
        %359 = vst [vmem:[%s244 + $0x18] sm:$0xff] %v354
        %s360 = sand.u32 %s122, 1
        %s361 = scalar_lea.sflag [#allocation4], %s360
        %s362 = sand.u32 %s122, 1
        %s363 = smul.addr %s362, 32
        %s364 = scalar_lea.vmem [#allocation5], %s363
        // Predicated region
        $region37: #{tpu_custom_call.1} parent=31 // pred_check
          %p365 = pneg %p132
        $region38: #{tpu_custom_call.1} parent=31 // pred_check_branch
          %367 = sbr.rel (%p365) target = $region40
        $region39: #{tpu_custom_call.1} parent=31 // pred_region
          %s368 = smul.u32 2, %s24
          %370 = vsyncadd %s361, 0
          %s371 = smul.addr %s368, 2
          %s372 = sadd.s32 %s25, %s371
          %s373 = smul.addr %s372, 8
          %s374 = scalar_lea.hbm %s3, %s373
          %s375 = sshll.u32 %s364, 4
          %s376 = int_to_ptr.vmem [resolvable:$true] %s375
          %s377 = sshll.u32 %s374, 4
          %s378 = int_to_ptr.hbm [resolvable:$true] %s377
          %383 = dma.vmem_to_hbm [thread:$0]  %s376, 512, %s378, %s361, 128, 128, 8
        $region40: #{tpu_custom_call.1} parent=31 // pred_fallthru
          _
      $region32: #{tpu_custom_call.1} parent=5 // pred_fallthru
        _
      %p384 = scmp.le.s32.totalorder 2, %s15
      // Predicated region
      $region41: #{tpu_custom_call.1} parent=5 // pred_check
        %p385 = pneg %p384
      $region42: #{tpu_custom_call.1} parent=5 // pred_check_branch
        %387 = sbr.rel (%p385) target = $region44
      $region43: #{tpu_custom_call.1} parent=5 // pred_region
        %s388 = ssub.s32 %s15, 2
        // Predicated region
        $region45: #{tpu_custom_call.1} parent=43 // pred_check
          %p389 = pneg %p138
        $region46: #{tpu_custom_call.1} parent=43 // pred_check_branch
          %391 = sbr.rel (%p389) target = $region48
        $region47: #{tpu_custom_call.1} parent=43 // pred_region
          %s392 = sand.u32 %s123, 1
          %s393 = scalar_lea.sflag [#allocation4], %s392
          %s394 = sand.u32 %s123, 1
          %s395 = smul.addr %s394, 32
          %s396 = scalar_lea.vmem [#allocation5], %s395
          %398 = dma.done %s393, 512
        $region48: #{tpu_custom_call.1} parent=43 // pred_fallthru
          _
      $region44: #{tpu_custom_call.1} parent=5 // pred_fallthru
        _
    $region6: #{tpu_custom_call.1} parent=1 // loop_footer
      %s19 = sadd.s32 1, %s15
    $region7: #{tpu_custom_call.1} parent=1 // loop_footer_branch
      %14 = sbr.rel target = $region3
    $region8: #{tpu_custom_call.1} parent=1 // loop_exit
      _
    %399 = vsyncpa [#allocation3], 1
    %s400 = scalar_lea.sflag [#allocation3], 1
    %401 = vsyncpa %s400, 1
    %402 = vsyncpa [#allocation4], 1
    %s403 = scalar_lea.sflag [#allocation4], 1
    %404 = vsyncpa %s403, 1

</llo_original>
